<compile_context>
chip_gen: v7x
topology: tpu7x:2x2x1
jax: 0.10.0
libtpu: 0.0.40
codegen_flags: <defaults>
</compile_context>

<pallas_src>
import functools
import math

import jax
import jax.numpy as jnp
from jax.experimental import pallas as pl
from jax.experimental.pallas import tpu as pltpu


def _pow(base, gamma):
    """(base)**gamma with a cheap unrolled-multiply path for small int gamma."""
    g = float(gamma)
    if g.is_integer() and 0.0 <= g <= 8.0:
        n = int(g)
        if n == 0:
            return jnp.ones_like(base)
        out = base
        for _ in range(n - 1):
            out = out * base
        return out
    return jnp.power(base, g)


def _focal_elementwise(x, t, alpha, gamma):
    """Per-element sigmoid focal loss (f32 math)."""
    x = x.astype(jnp.float32)
    t = t.astype(jnp.float32)
    p = jax.nn.sigmoid(x)
    # numerically stable binary_cross_entropy_with_logits
    ce = jnp.maximum(x, 0.0) - x * t + jnp.log1p(jnp.exp(-jnp.abs(x)))
    p_t = p * t + (1.0 - p) * (1.0 - t)
    loss = ce * _pow(jnp.maximum(1.0 - p_t, 0.0), gamma)
    if alpha >= 0:
        loss = (alpha * t + (1.0 - alpha) * (1.0 - t)) * loss
    return loss


def _focal_map_kernel(x_ref, t_ref, o_ref, *, alpha, gamma):
    """reduction='none': write the element-wise loss tile."""
    o_ref[...] = _focal_elementwise(x_ref[...], t_ref[...], alpha, gamma).astype(
        o_ref.dtype
    )


def _focal_reduce_kernel(x_ref, t_ref, o_ref, *, alpha, gamma, n_valid):
    """reduction='mean'/'sum': write a (1, 1, C) partial sum per grid tile."""
    loss = _focal_elementwise(x_ref[...], t_ref[...], alpha, gamma)
    tb, c = loss.shape
    row0 = pl.program_id(0) * tb
    rows = jax.lax.broadcasted_iota(jnp.int32, (tb, c), 0) + row0
    cols = jax.lax.broadcasted_iota(jnp.int32, (tb, c), 1)
    flat = rows * c + cols
    loss = jnp.where(flat < n_valid, loss, 0.0)  # mask explicit zero-padding
    o_ref[...] = jnp.sum(loss, axis=0).reshape(1, 1, c)


def sigmoid_focal_loss(
    inputs,
    targets,
    alpha=0.3,
    gamma=3.0,
    reduction="mean",
    *,
    block_rows=512,
    lane_width=512,
    vmem_limit_bytes=32 * 1024 * 1024,
):
    assert inputs.shape == targets.shape
    assert reduction in ("none", "mean", "sum")
    orig_shape = inputs.shape
    n = int(math.prod(orig_shape)) if orig_shape else 1

    # Lane-dense slab: last dim C is a multiple of 128 (<= lane_width).
    c = max(128, min(int(lane_width), 128 * pl.cdiv(n, 128)))
    rows = pl.cdiv(n, c)
    tb = min(int(block_rows), 8 * pl.cdiv(rows, 8))  # multiple of 8
    rows_p = tb * pl.cdiv(rows, tb)                  # rows padded to tile multiple
    pad = rows_p * c - n

    xf = jnp.ravel(inputs).astype(jnp.float32)
    tf = jnp.ravel(targets).astype(jnp.float32)
    if pad:
        xf = jnp.pad(xf, (0, pad))
        tf = jnp.pad(tf, (0, pad))
    x2 = xf.reshape(rows_p, c)
    t2 = tf.reshape(rows_p, c)

    num_tiles = rows_p // tb
    grid = (num_tiles,)
    in_specs = [
        pl.BlockSpec((tb, c), lambda i: (i, 0)),
        pl.BlockSpec((tb, c), lambda i: (i, 0)),
    ]
    compiler_params = pltpu.CompilerParams(
        dimension_semantics=("parallel",),
        vmem_limit_bytes=vmem_limit_bytes,
    )

    if reduction == "none":
        kernel = functools.partial(_focal_map_kernel, alpha=alpha, gamma=gamma)
        out = pl.pallas_call(
            kernel,
            out_shape=jax.ShapeDtypeStruct((rows_p, c), jnp.float32),
            grid_spec=pltpu.PrefetchScalarGridSpec(
                num_scalar_prefetch=0,
                grid=grid,
                in_specs=in_specs,
                out_specs=pl.BlockSpec((tb, c), lambda i: (i, 0)),
            ),
            compiler_params=compiler_params,
        )(x2, t2)
        return out.reshape(-1)[:n].reshape(orig_shape)

    # 'mean' / 'sum': per-tile partial sums inside the kernel (no full
    # element-wise loss round-trip through HBM); tiny final sum in plain JAX.
    kernel = functools.partial(
        _focal_reduce_kernel, alpha=alpha, gamma=gamma, n_valid=n
    )
    partials = pl.pallas_call(
        kernel,
        out_shape=jax.ShapeDtypeStruct((num_tiles, 1, c), jnp.float32),
        grid_spec=pltpu.PrefetchScalarGridSpec(
            num_scalar_prefetch=0,
            grid=grid,
            in_specs=in_specs,
            out_specs=pl.BlockSpec((1, 1, c), lambda i: (i, 0, 0)),
        ),
        compiler_params=compiler_params,
    )(x2, t2)
    total = jnp.sum(partials)
    if reduction == "sum":
        return total
    return total / jnp.float32(n)


class FocalLoss:
    """JAX/Pallas equivalent of the PyTorch FocalLoss module."""

    def __init__(self, alpha=0.3, gamma=3, reduction="mean"):
        self.alpha = alpha
        self.gamma = gamma
        self.reduction = reduction

    def __call__(self, inputs, target):
        return sigmoid_focal_loss(
            inputs,
            target,
            alpha=self.alpha,
            gamma=self.gamma,
            reduction=self.reduction,
        )


def _reference(inputs, targets, alpha, gamma, reduction):
    x = inputs.astype(jnp.float32)
    t = targets.astype(jnp.float32)
    p = jax.nn.sigmoid(x)
    ce = jnp.maximum(x, 0.0) - x * t + jnp.log1p(jnp.exp(-jnp.abs(x)))
    p_t = p * t + (1.0 - p) * (1.0 - t)
    loss = ce * jnp.power(1.0 - p_t, gamma)
    if alpha >= 0:
        loss = (alpha * t + (1.0 - alpha) * (1.0 - t)) * loss
    if reduction == "mean":
        return loss.mean()
    if reduction == "sum":
        return loss.sum()
    return loss


if __name__ == "__main__":
    key = jax.random.PRNGKey(0)
    batch, num_classes = 8, 32
    k1, k2 = jax.random.split(key)
    logits = jax.random.normal(k1, (batch, num_classes), dtype=jnp.float32) * 2.0
    targets = (jax.random.uniform(k2, (batch, num_classes)) > 0.5).astype(jnp.float32)

    ok = True
    for reduction in ("mean", "sum", "none"):
        out = sigmoid_focal_loss(
            logits, targets, alpha=0.3, gamma=3.0, reduction=reduction
        )
        out = jax.block_until_ready(out)
        ref = _reference(logits, targets, 0.3, 3.0, reduction)
        if not jnp.allclose(out, ref, atol=1e-5, rtol=1e-5):
            ok = False

    # Module-style call matching the torch defaults (alpha=0.3, gamma=3, mean).
    loss_mod = FocalLoss(alpha=0.3, gamma=3, reduction="mean")
    out_mod = jax.block_until_ready(loss_mod(logits, targets))
    ref_mod = _reference(logits, targets, 0.3, 3.0, "mean")
    if not jnp.allclose(out_mod, ref_mod, atol=1e-5, rtol=1e-5):
        ok = False

    if ok:
        print("KERNEL_OK")
</pallas_src>

<mosaic_0001>
module attributes {stable_mosaic.version = 11 : i64} {
  func.func @_focal_reduce_kernel(%arg0: i32, %arg1: memref<8x256xf32, #tpu.memory_space<vmem>>, %arg2: memref<8x256xf32, #tpu.memory_space<vmem>>, %arg3: memref<1x1x256xf32, #tpu.memory_space<vmem>>) attributes {dimension_semantics = [#tpu.dimension_semantics<parallel>], iteration_bounds = array<i64: 1>, scalar_prefetch = 0 : i64, scratch_operands = 0 : i64, tpu.core_type = #tpu.core_type<tc>, window_params = [{transform_indices = @transform_0, window_bounds = array<i64: 8, 256>}, {transform_indices = @transform_1, window_bounds = array<i64: 8, 256>}, {transform_indices = @transform_2, window_bounds = array<i64: 1, 1, 256>}]} {
    %c0 = arith.constant 0 : index
    %c0_0 = arith.constant 0 : index
    %0 = vector.load %arg1[%c0, %c0_0] : memref<8x256xf32, #tpu.memory_space<vmem>>, vector<8x256xf32>
    %c0_1 = arith.constant 0 : index
    %c0_2 = arith.constant 0 : index
    %1 = vector.load %arg2[%c0_1, %c0_2] : memref<8x256xf32, #tpu.memory_space<vmem>>, vector<8x256xf32>
    %2 = arith.negf %0 : vector<8x256xf32>
    %3 = math.exp %2 : vector<8x256xf32>
    %cst = arith.constant 1.000000e+00 : f32
    %4 = vector.broadcast %cst : f32 to vector<8x256xf32>
    %5 = arith.addf %4, %3 : vector<8x256xf32>
    %6 = arith.divf %4, %5 : vector<8x256xf32>
    %cst_3 = arith.constant 0.000000e+00 : f32
    %7 = vector.broadcast %cst_3 : f32 to vector<8x256xf32>
    %8 = arith.maximumf %0, %7 : vector<8x256xf32>
    %9 = arith.mulf %0, %1 : vector<8x256xf32>
    %10 = arith.subf %8, %9 : vector<8x256xf32>
    %11 = math.absf %0 : vector<8x256xf32>
    %cst_4 = arith.constant 0.000000e+00 : f32
    %12 = vector.broadcast %cst_4 : f32 to vector<8x256xf32>
    %13 = arith.subf %12, %11 : vector<8x256xf32>
    %14 = math.exp %13 : vector<8x256xf32>
    %15 = math.log1p %14 : vector<8x256xf32>
    %16 = arith.addf %10, %15 : vector<8x256xf32>
    %17 = arith.mulf %6, %1 : vector<8x256xf32>
    %cst_5 = arith.constant 1.000000e+00 : f32
    %18 = vector.broadcast %cst_5 : f32 to vector<8x256xf32>
    %19 = arith.subf %18, %6 : vector<8x256xf32>
    %cst_6 = arith.constant 1.000000e+00 : f32
    %20 = vector.broadcast %cst_6 : f32 to vector<8x256xf32>
    %21 = arith.subf %20, %1 : vector<8x256xf32>
    %22 = arith.mulf %19, %21 : vector<8x256xf32>
    %23 = arith.addf %17, %22 : vector<8x256xf32>
    %cst_7 = arith.constant 1.000000e+00 : f32
    %24 = vector.broadcast %cst_7 : f32 to vector<8x256xf32>
    %25 = arith.subf %24, %23 : vector<8x256xf32>
    %cst_8 = arith.constant 0.000000e+00 : f32
    %26 = vector.broadcast %cst_8 : f32 to vector<8x256xf32>
    %27 = arith.maximumf %25, %26 : vector<8x256xf32>
    %28 = arith.mulf %27, %27 : vector<8x256xf32>
    %29 = arith.mulf %28, %27 : vector<8x256xf32>
    %30 = arith.mulf %16, %29 : vector<8x256xf32>
    %cst_9 = arith.constant 3.000000e-01 : f32
    %31 = vector.broadcast %cst_9 : f32 to vector<8x256xf32>
    %32 = arith.mulf %31, %1 : vector<8x256xf32>
    %cst_10 = arith.constant 1.000000e+00 : f32
    %33 = vector.broadcast %cst_10 : f32 to vector<8x256xf32>
    %34 = arith.subf %33, %1 : vector<8x256xf32>
    %cst_11 = arith.constant 0.699999988 : f32
    %35 = vector.broadcast %cst_11 : f32 to vector<8x256xf32>
    %36 = arith.mulf %35, %34 : vector<8x256xf32>
    %37 = arith.addf %32, %36 : vector<8x256xf32>
    %38 = arith.mulf %37, %30 : vector<8x256xf32>
    %c8_i32 = arith.constant 8 : i32
    %39 = arith.muli %arg0, %c8_i32 : i32
    %40 = tpu.iota {dimensions = array<i32: 0>} : vector<8x256xi32>
    %41 = vector.broadcast %39 : i32 to vector<8x256xi32>
    %42 = arith.addi %40, %41 : vector<8x256xi32>
    %43 = tpu.iota {dimensions = array<i32: 1>} : vector<8x256xi32>
    %c256_i32 = arith.constant 256 : i32
    %44 = vector.broadcast %c256_i32 : i32 to vector<8x256xi32>
    %45 = arith.muli %42, %44 : vector<8x256xi32>
    %46 = arith.addi %45, %43 : vector<8x256xi32>
    %c256_i32_12 = arith.constant 256 : i32
    %47 = vector.broadcast %c256_i32_12 : i32 to vector<8x256xi32>
    %48 = arith.cmpi slt, %46, %47 : vector<8x256xi32>
    %cst_13 = arith.constant 0.000000e+00 : f32
    %49 = vector.broadcast %cst_13 : f32 to vector<8x256xf32>
    %50 = arith.select %48, %38, %49 : vector<8x256xi1>, vector<8x256xf32>
    %cst_14 = arith.constant dense<0.000000e+00> : vector<256xf32>
    %51 = vector.multi_reduction <add>, %50, %cst_14 [0] : vector<8x256xf32> to vector<256xf32>
    %52 = vector.shape_cast %51 : vector<256xf32> to vector<1x1x256xf32>
    %c0_15 = arith.constant 0 : index
    %c0_16 = arith.constant 0 : index
    %c0_17 = arith.constant 0 : index
    %53 = vector.load %arg3[%c0_15, %c0_16, %c0_17] : memref<1x1x256xf32, #tpu.memory_space<vmem>>, vector<1x1x256xf32>
    tpu.vector_store %arg3[%c0_15, %c0_16, %c0_17], %52 {strides = array<i32>} : memref<1x1x256xf32, #tpu.memory_space<vmem>>, vector<1x1x256xf32>,
    return
  }
  func.func @transform_0(%arg0: i32) -> (i32, i32) {
    %c0_i32 = arith.constant 0 : i32
    %c0_i32_0 = arith.constant 0 : i32
    return %arg0, %c0_i32 : i32, i32
  }
  func.func @transform_1(%arg0: i32) -> (i32, i32) {
    %c0_i32 = arith.constant 0 : i32
    %c0_i32_0 = arith.constant 0 : i32
    return %arg0, %c0_i32 : i32, i32
  }
  func.func @transform_2(%arg0: i32) -> (i32, i32, i32) {
    %c0_i32 = arith.constant 0 : i32
    %c0_i32_0 = arith.constant 0 : i32
    %c0_i32_1 = arith.constant 0 : i32
    return %arg0, %c0_i32, %c0_i32_0 : i32, i32, i32
  }
}

</mosaic_0001>

<llo_original>
// kernel: tpu_custom_call.1
$region0: #{tpu_custom_call.1}
  #allocation0 [shape = 'u32[]', space=smem, size = 0x4, offset = 0x4, fixed_abs, tag = 'smem constant byte address 0x4 - core index']
  #allocation1 [shape = 'u32[144,128]{1,0:T(1,128)}', space=vmem, size = 0x12000, scoped, tag = 'internal scratch']
  %s0 = inlined_call_operand.hbm [shape: f32[8,256], index: 0, kind: input, shape index: {}]
  %s1 = inlined_call_operand.hbm [shape: f32[8,256], index: 1, kind: input, shape index: {}]
  %s2 = inlined_call_operand.hbm [shape: f32[1,1,256], index: 2, kind: output, shape index: {}]
  %s3 = sld [smem:[#allocation0]]
  $region26: #{tpu_custom_call.1} parent=0
    _
  %s5 = ssub.s32 1, %s3
  %s6 = scalar_select 0, %s5, %s3
  $region1: #{tpu_custom_call.1} parent=0
    #allocation2 [shape = 'u8[8192]{0}', space=vmem, size = 0x2000, scoped, tag = 'input window, operand 0, single buffered']
    #allocation3 [shape = 's32[1]{0}', space=sflag, size = 0x4, scoped, tag = 'scoped memory for tpu_custom_call.1']
    #allocation4 [shape = 's32[1]{0}', space=sflag, size = 0x4, scoped, tag = 'scoped memory for tpu_custom_call.1']
    #allocation5 [shape = 'u8[8192]{0}', space=vmem, size = 0x2000, scoped, tag = 'input window, operand 1, single buffered']
    #allocation6 [shape = 's32[1]{0}', space=sflag, size = 0x4, scoped, tag = 'scoped memory for tpu_custom_call.1']
    #allocation7 [shape = 'u8[1024]{0}', space=vmem, size = 0x400, scoped, tag = 'output window, operand 0, single buffered']
    %7 = vsyncpa [#allocation3], 0
    %8 = vsyncpa [#allocation6], 0
    %9 = vsyncpa [#allocation4], 0
    // Predicated region
    $region2: #{tpu_custom_call.1} parent=1 // pred_check
      _
    $region3: #{tpu_custom_call.1} parent=1 // pred_check_branch
      %11 = sbr.rel (0) target = $region5
    $region4: #{tpu_custom_call.1} parent=1 // pred_region
      %s13 = ssub.s32 256, 256
      %14 = vsyncadd [#allocation3], %s13
      %s16 = sshll.u32 [#allocation2], 4
      %s17 = int_to_ptr.vmem [resolvable:$true] %s16
      %19 = dma.hbm_to_vmem [thread:$0]  %s0, 256, %s17, [#allocation3]
    $region5: #{tpu_custom_call.1} parent=1 // pred_fallthru
      _
    // Predicated region
    $region6: #{tpu_custom_call.1} parent=1 // pred_check
      _
    $region7: #{tpu_custom_call.1} parent=1 // pred_check_branch
      %21 = sbr.rel (0) target = $region9
    $region8: #{tpu_custom_call.1} parent=1 // pred_region
      %s23 = ssub.s32 256, 256
      %24 = vsyncadd [#allocation6], %s23
      %s26 = sshll.u32 [#allocation5], 4
      %s27 = int_to_ptr.vmem [resolvable:$true] %s26
      %29 = dma.hbm_to_vmem [thread:$0]  %s1, 256, %s27, [#allocation6]
    $region9: #{tpu_custom_call.1} parent=1 // pred_fallthru
      _
    // Predicated region
    $region10: #{tpu_custom_call.1} parent=1 // pred_check
      _
    $region11: #{tpu_custom_call.1} parent=1 // pred_check_branch
      %31 = sbr.rel (0) target = $region13
    $region12: #{tpu_custom_call.1} parent=1 // pred_region
      %32 = dma.done [#allocation3], 256
    $region13: #{tpu_custom_call.1} parent=1 // pred_fallthru
      _
    // Predicated region
    $region14: #{tpu_custom_call.1} parent=1 // pred_check
      _
    $region15: #{tpu_custom_call.1} parent=1 // pred_check_branch
      %34 = sbr.rel (0) target = $region17
    $region16: #{tpu_custom_call.1} parent=1 // pred_region
      %35 = dma.done [#allocation6], 256
    $region17: #{tpu_custom_call.1} parent=1 // pred_fallthru
      _
    %v36 = vld [vmem:[#allocation2] sm:$0xff]
    %v37 = vld [vmem:[#allocation2 + $0x8] sm:$0xff]
    %v38 = vld [vmem:[#allocation5] sm:$0xff]
    %v39 = vld [vmem:[#allocation5 + $0x8] sm:$0xff]
    %v40 = vxor.u32 %v36, 2147483648
    %v41 = vxor.u32 %v37, 2147483648
    %v42 = vmul.f32 %v40, 1.442695
    %v43 = vpow.pop %v42
    %v44 = vmul.f32 %v41, 1.442695
    %v45 = vpow.pop %v44
    %v46 = vadd.f32 %v43, 1.0
    %v47 = vadd.f32 %v45, 1.0
    %v48 = vrcp.pop %v46
    %v49 = vmul.f32 1.0, %v48
    %v50 = vrcp.pop %v47
    %v51 = vmul.f32 1.0, %v50
    %v52 = vmax.f32 %v36, 0.0
    %v53 = vmax.f32 %v37, 0.0
    %v54 = vmul.f32 %v36, %v38
    %v55 = vmul.f32 %v37, %v39
    %v56 = vsub.f32 %v52, %v54
    %v57 = vsub.f32 %v53, %v55
    %v58 = vand.u32 2147483647, %v36
    %v59 = vand.u32 2147483647, %v37
    %v60 = vsub.f32 0.0, %v58
    %v61 = vsub.f32 0.0, %v59
    %v62 = vmul.f32 %v60, 1.442695
    %v63 = vpow.pop %v62
    %v64 = vmul.f32 %v61, 1.442695
    %v65 = vpow.pop %v64
    %v66 = vadd.f32 %v63, 1.0
    %v67 = vlog2.pop %v66
    %v68 = vmul.f32 %v67, 0.6931472
    %v69 = vmul.f32 -0.5, %v63
    %v70 = vadd.f32 %v69, 1.0
    %v71 = vmul.f32 %v70, %v63
    %v72 = vand.u32 2147483647, %v63
    %vm73 = vcmp.lt.f32.partialorder %v72, 0.0004427343
    %v74 = vsel %vm73, %v71, %v68
    %v75 = vadd.f32 %v65, 1.0
    %v76 = vlog2.pop %v75
    %v77 = vmul.f32 %v76, 0.6931472
    %v78 = vmul.f32 -0.5, %v65
    %v79 = vadd.f32 %v78, 1.0
    %v80 = vmul.f32 %v79, %v65
    %v81 = vand.u32 2147483647, %v65
    %vm82 = vcmp.lt.f32.partialorder %v81, 0.0004427343
    %v83 = vsel %vm82, %v80, %v77
    %v84 = vadd.f32 %v56, %v74
    %v85 = vadd.f32 %v57, %v83
    %v86 = vmul.f32 %v49, %v38
    %v87 = vmul.f32 %v51, %v39
    %v88 = vsub.f32 1.0, %v49
    %v89 = vsub.f32 1.0, %v51
    %v90 = vsub.f32 1.0, %v38
    %v91 = vsub.f32 1.0, %v39
    %v92 = vmul.f32 %v88, %v90
    %v93 = vmul.f32 %v89, %v91
    %v94 = vadd.f32 %v86, %v92
    %v95 = vadd.f32 %v87, %v93
    %v96 = vsub.f32 1.0, %v94
    %v97 = vsub.f32 1.0, %v95
    %v98 = vmax.f32 %v96, 0.0
    %v99 = vmax.f32 %v97, 0.0
    %v100 = vmul.f32 %v98, %v98
    %v101 = vmul.f32 %v99, %v99
    %v102 = vmul.f32 %v100, %v98
    %v103 = vmul.f32 %v101, %v99
    %v104 = vmul.f32 %v84, %v102
    %v105 = vmul.f32 %v85, %v103
    %v106 = vmul.f32 %v38, 0.3
    %v107 = vmul.f32 %v39, 0.3
    %v108 = vmul.f32 %v90, 0.7
    %v109 = vmul.f32 %v91, 0.7
    %v110 = vadd.f32 %v106, %v108
    %v111 = vadd.f32 %v107, %v109
    %v112 = vmul.f32 %v110, %v104
    %v113 = vmul.f32 %v111, %v105
    %s114 = smul.u32 0, 8
    %v115 = vlaneseq
    %v116 = vshrl.u32 %v115, 7
    %v117 = vstv %s114
    %v118 = vadd.s32 %v116, %v117
    %v119 = vlaneseq
    %v120 = vand.u32 %v119, 127
    %v121 = vadd.s32 %v120, 128
    %v122 = vmul.u32 %v118, 256
    %v123 = vadd.s32 %v122, %v120
    %v124 = vadd.s32 %v122, %v121
    %vm125 = vcmp.lt.s32.totalorder %v123, 256
    %vm126 = vcmp.lt.s32.totalorder %v124, 256
    %v127 = vsel %vm125, %v112, 0.0
    %v128 = vsel %vm126, %v113, 0.0
    %v129 = vrot.slane %v127, 4
    %v130 = vadd.f32 %v127, %v129
    %v131 = vrot.slane %v130, 2
    %v132 = vadd.f32 %v130, %v131
    %v133 = vrot.slane %v132, 1
    %v134 = vadd.f32 %v132, %v133
    %v135 = vrot.slane %v128, 4
    %v136 = vadd.f32 %v128, %v135
    %v137 = vrot.slane %v136, 2
    %v138 = vadd.f32 %v136, %v137
    %v139 = vrot.slane %v138, 1
    %v140 = vadd.f32 %v138, %v139
    %v143 = vcombine.low %v134, %v140
    %v145 = vunpack.c.l.s4 1966171168
    %v146 = vunpack.c.0.s8 %v145
    %v147 = vlaneseq
    %v148 = vshrl.u32 %v147, 7
    %v149 = vsub.s32 %v146, %v148
    %v150 = vrot.slane %v143, %v149
    %v152 = vunpack.c.l.s4 1966171168
    %v153 = vunpack.c.0.s8 %v152
    %v154 = vlaneseq
    %v155 = vshrl.u32 %v154, 7
    %v156 = vsub.s32 %v153, %v155
    %v157 = vrot.slane %v150, %v156
    %v159 = vlaneseq
    %vm160 = vcmp.ge.s32.totalorder %v159, 0
    %vm161 = vcmp.lt.s32.totalorder %v159, 256
    %vm162 = vmand %vm160, %vm161
    %163 = vst.msk [vmem:[#allocation7] sm:$0x3] %vm162, %v157
    // Predicated region
    $region18: #{tpu_custom_call.1} parent=1 // pred_check
      _
    $region19: #{tpu_custom_call.1} parent=1 // pred_check_branch
      %165 = sbr.rel (0) target = $region21
    $region20: #{tpu_custom_call.1} parent=1 // pred_region
      %s167 = ssub.s32 32, 32
      %168 = vsyncadd [#allocation4], %s167
      %s170 = sshll.u32 [#allocation7], 4
      %s171 = int_to_ptr.vmem [resolvable:$true] %s170
      %173 = dma.vmem_to_hbm [thread:$0]  %s171, 32, %s2, [#allocation4]
    $region21: #{tpu_custom_call.1} parent=1 // pred_fallthru
      _
    // Predicated region
    $region22: #{tpu_custom_call.1} parent=1 // pred_check
      _
    $region23: #{tpu_custom_call.1} parent=1 // pred_check_branch
      %175 = sbr.rel (0) target = $region25
    $region24: #{tpu_custom_call.1} parent=1 // pred_region
      %176 = dma.done [#allocation4], 32
    $region25: #{tpu_custom_call.1} parent=1 // pred_fallthru
      _
    %177 = vsyncpa [#allocation3], 1
    %178 = vsyncpa [#allocation6], 1
    %179 = vsyncpa [#allocation4], 1

</llo_original>
